<compile_context>
chip_gen: v7x
topology: tpu7x:2x2x1
jax: 0.10.0
libtpu: 0.0.40
codegen_flags: <defaults>
</compile_context>

<pallas_src>
import jax
import jax.numpy as jnp
from jax.experimental import pallas as pl
from jax.experimental.pallas import tpu as pltpu


def _round_up(x, m):
    return (x + m - 1) // m * m


def critic_kernel(x_ref, w1_ref, b1_ref, w2_ref, b2_ref, w3_ref, b3_ref, o_ref):
    # Layer 1: single K=(F+A) bf16 MXU matmul, f32 accumulation + f32 epilogue.
    h1 = jnp.dot(x_ref[...], w1_ref[...], preferred_element_type=jnp.float32)
    h1 = jnp.maximum(h1 + b1_ref[...], 0.0)                       # ReLU (VPU, f32)

    # Layer 2: (TB,128) @ (128,64), bf16 operands, f32 accumulation.
    h2 = jnp.dot(h1.astype(jnp.bfloat16), w2_ref[...],
                 preferred_element_type=jnp.float32)
    h2 = jnp.maximum(h2 + b2_ref[...], 0.0)                       # ReLU

    # Layer 3 (out_features = 1): VPU multiply + lane reduce instead of an MXU
    # pass whose output is only one lane wide.  b3 is a scalar read from SMEM.
    q = jnp.sum(h2 * w3_ref[...], axis=-1, keepdims=True) + b3_ref[0, 0]
    o_ref[...] = q.astype(o_ref.dtype)                            # (TB, 1)


def critic_forward(state, action, params, *, block_b=2048):
    """state: (B, F) f32, action: (B, A) f32 -> (B, 1) f32 Q values."""
    w1, b1, w2, b2, w3, b3 = params
    B, F = state.shape
    A = action.shape[1]
    D = F + A
    H1 = w1.shape[1]
    H2 = w2.shape[1]

    # Fused upstream concat + bf16 cast: one tiny (B, F+A) bf16 slab feeds a
    # single K=D matmul (merged layer-1 K-pass, half the HBM input bytes).
    x = jnp.concatenate([state, action], axis=1).astype(jnp.bfloat16)

    # Batch tile: multiple of 16 (bf16 sublane packing).  No batch padding —
    # the last grid step is a ragged block and Pallas masks its writeback.
    # For best v7x utilisation choose block_b so that cdiv(B, TB) >= 2.
    TB = min(_round_up(block_b, 16), _round_up(B, 16))
    grid = (pl.cdiv(B, TB),)

    const = lambda i: (0, 0)      # weights/biases: DMA once, stay VMEM-resident
    batched = lambda i: (i, 0)    # batch-tiled operand / output

    out = pl.pallas_call(
        critic_kernel,
        out_shape=jax.ShapeDtypeStruct((B, 1), jnp.float32),
        grid=grid,
        in_specs=[
            pl.BlockSpec((TB, D), batched),                      # x = [state|action] bf16
            pl.BlockSpec((D, H1), const),                        # W1 bf16
            pl.BlockSpec((1, H1), const),                        # b1 f32
            pl.BlockSpec((H1, H2), const),                       # W2 bf16
            pl.BlockSpec((1, H2), const),                        # b2 f32
            pl.BlockSpec((1, H2), const),                        # W3 as f32 row
            pl.BlockSpec(memory_space=pltpu.MemorySpace.SMEM),   # b3 scalar
        ],
        out_specs=pl.BlockSpec((TB, 1), batched),
        compiler_params=pltpu.CompilerParams(
            dimension_semantics=("parallel",),
            vmem_limit_bytes=32 * 1024 * 1024),
    )(x, w1, b1, w2, b2, w3, b3)
    return out


def init_params(key, feature_dim, action_dim):
    """nn.Linear-style init U(-1/sqrt(fan_in), +).  W1/W2 stored bf16 (MXU
    operands), biases f32, W3 kept as an f32 (1, 64) row for the VPU reduce."""
    d_in = feature_dim + action_dim
    dims = [(d_in, 128), (128, 64), (64, 1)]
    raw = []
    for fan_in, fan_out in dims:
        key, kw, kb = jax.random.split(key, 3)
        bound = 1.0 / (fan_in ** 0.5)
        # stored (in, out) so the kernel computes x @ W
        w = jax.random.uniform(kw, (fan_in, fan_out), jnp.float32, -bound, bound)
        b = jax.random.uniform(kb, (1, fan_out), jnp.float32, -bound, bound)
        raw.append((w, b))
    (w1, b1), (w2, b2), (w3, b3) = raw
    return (w1.astype(jnp.bfloat16), b1,
            w2.astype(jnp.bfloat16), b2,
            w3.T,                      # (1, 64) f32 row, lane-aligned
            b3.reshape(1, 1))          # scalar, lives in SMEM inside the kernel


def critic_reference(state, action, params):
    """f32 reference using the same (bf16-stored) weights upcast to f32."""
    w1, b1, w2, b2, w3, b3 = params
    x = jnp.concatenate([state, action], axis=1)
    h1 = jnp.maximum(x @ w1.astype(jnp.float32) + b1, 0.0)
    h2 = jnp.maximum(h1 @ w2.astype(jnp.float32) + b2, 0.0)
    return h2 @ w3.T + b3


if __name__ == "__main__":
    B, F, A = 20, 12, 4
    key = jax.random.PRNGKey(0)
    ks, ka, kp = jax.random.split(key, 3)
    state = jax.random.normal(ks, (B, F), jnp.float32)
    action = jax.random.normal(ka, (B, A), jnp.float32)
    params = init_params(kp, F, A)

    # block_b=16 -> TB=16, grid=(2,) with a ragged 4-row tail: exercises the
    # pad-free boundary-block masking.  Default path runs one (ragged) tile.
    q_grid = jax.block_until_ready(critic_forward(state, action, params, block_b=16))
    q_single = jax.block_until_ready(critic_forward(state, action, params))

    q_ref = critic_reference(state, action, params)
    assert q_grid.shape == (B, 1) and q_single.shape == (B, 1)
    # bf16 MXU operands (f32 accumulation) -> compare at ~1e-2 tolerance.
    assert jnp.allclose(q_grid, q_ref, atol=2e-2, rtol=2e-2)
    assert jnp.allclose(q_single, q_ref, atol=2e-2, rtol=2e-2)
    print("KERNEL_OK")
</pallas_src>

<mosaic_0001>
module attributes {stable_mosaic.version = 11 : i64} {
  func.func @critic_kernel(%arg0: i32, %arg1: memref<16x16xbf16, #tpu.memory_space<vmem>>, %arg2: memref<16x128xbf16, #tpu.memory_space<vmem>>, %arg3: memref<1x128xf32, #tpu.memory_space<vmem>>, %arg4: memref<128x64xbf16, #tpu.memory_space<vmem>>, %arg5: memref<1x64xf32, #tpu.memory_space<vmem>>, %arg6: memref<1x64xf32, #tpu.memory_space<vmem>>, %arg7: memref<1x1xf32, #tpu.memory_space<smem>>, %arg8: memref<16x1xf32, #tpu.memory_space<vmem>>) attributes {dimension_semantics = [#tpu.dimension_semantics<parallel>], iteration_bounds = array<i64: 2>, scalar_prefetch = 0 : i64, scratch_operands = 0 : i64, tpu.core_type = #tpu.core_type<tc>, window_params = [{transform_indices = @transform_0, window_bounds = array<i64: 16, 16>}, {pipeline_mode = #tpu.pipeline_mode<synchronous>, transform_indices = @transform_1, window_bounds = array<i64: 16, 128>}, {pipeline_mode = #tpu.pipeline_mode<synchronous>, transform_indices = @transform_2, window_bounds = array<i64: 1, 128>}, {pipeline_mode = #tpu.pipeline_mode<synchronous>, transform_indices = @transform_3, window_bounds = array<i64: 128, 64>}, {pipeline_mode = #tpu.pipeline_mode<synchronous>, transform_indices = @transform_4, window_bounds = array<i64: 1, 64>}, {pipeline_mode = #tpu.pipeline_mode<synchronous>, transform_indices = @transform_5, window_bounds = array<i64: 1, 64>}, {transform_indices = @transform_6, window_bounds = array<i64: 1, 1>}, {transform_indices = @transform_7, window_bounds = array<i64: 16, 1>}]} {
    %c0 = arith.constant 0 : index
    %c0_0 = arith.constant 0 : index
    %0 = vector.load %arg1[%c0, %c0_0] : memref<16x16xbf16, #tpu.memory_space<vmem>>, vector<16x16xbf16>
    %c0_1 = arith.constant 0 : index
    %c0_2 = arith.constant 0 : index
    %1 = vector.load %arg2[%c0_1, %c0_2] : memref<16x128xbf16, #tpu.memory_space<vmem>>, vector<16x128xbf16>
    %cst = arith.constant dense<0.000000e+00> : vector<16x128xf32>
    %2 = tpu.matmul %0, %1, %cst {dimension_numbers = #tpu.dot_dimension_numbers<[1], [0], [0], [1], [0, 0, 1, 1], [], []>} : vector<16x16xbf16>, vector<16x128xbf16>, vector<16x128xf32> -> vector<16x128xf32>
    %c0_3 = arith.constant 0 : index
    %c0_4 = arith.constant 0 : index
    %3 = vector.load %arg3[%c0_3, %c0_4] : memref<1x128xf32, #tpu.memory_space<vmem>>, vector<1x128xf32>
    %4 = vector.broadcast %3 : vector<1x128xf32> to vector<16x128xf32>
    %5 = arith.addf %2, %4 : vector<16x128xf32>
    %cst_5 = arith.constant 0.000000e+00 : f32
    %6 = vector.broadcast %cst_5 : f32 to vector<16x128xf32>
    %7 = arith.maximumf %5, %6 : vector<16x128xf32>
    %8 = arith.truncf %7 : vector<16x128xf32> to vector<16x128xbf16>
    %c0_6 = arith.constant 0 : index
    %c0_7 = arith.constant 0 : index
    %9 = vector.load %arg4[%c0_6, %c0_7] : memref<128x64xbf16, #tpu.memory_space<vmem>>, vector<128x64xbf16>
    %cst_8 = arith.constant dense<0.000000e+00> : vector<16x64xf32>
    %10 = tpu.matmul %8, %9, %cst_8 {dimension_numbers = #tpu.dot_dimension_numbers<[1], [0], [0], [1], [0, 0, 1, 1], [], []>} : vector<16x128xbf16>, vector<128x64xbf16>, vector<16x64xf32> -> vector<16x64xf32>
    %c0_9 = arith.constant 0 : index
    %c0_10 = arith.constant 0 : index
    %11 = vector.load %arg5[%c0_9, %c0_10] : memref<1x64xf32, #tpu.memory_space<vmem>>, vector<1x64xf32>
    %12 = vector.broadcast %11 : vector<1x64xf32> to vector<16x64xf32>
    %13 = arith.addf %10, %12 : vector<16x64xf32>
    %cst_11 = arith.constant 0.000000e+00 : f32
    %14 = vector.broadcast %cst_11 : f32 to vector<16x64xf32>
    %15 = arith.maximumf %13, %14 : vector<16x64xf32>
    %c0_12 = arith.constant 0 : index
    %c0_13 = arith.constant 0 : index
    %16 = vector.load %arg6[%c0_12, %c0_13] : memref<1x64xf32, #tpu.memory_space<vmem>>, vector<1x64xf32>
    %17 = vector.broadcast %16 : vector<1x64xf32> to vector<16x64xf32>
    %18 = arith.mulf %15, %17 : vector<16x64xf32>
    %cst_14 = arith.constant dense<0.000000e+00> : vector<16xf32>
    %19 = vector.multi_reduction <add>, %18, %cst_14 [1] : vector<16x64xf32> to vector<16xf32>
    %20 = vector.shape_cast %19 : vector<16xf32> to vector<16x1xf32>
    %c0_15 = arith.constant 0 : index
    %c0_16 = arith.constant 0 : index
    %21 = memref.load %arg7[%c0_15, %c0_16] : memref<1x1xf32, #tpu.memory_space<smem>>
    %22 = vector.broadcast %21 : f32 to vector<16x1xf32>
    %23 = arith.addf %20, %22 : vector<16x1xf32>
    %c0_17 = arith.constant 0 : index
    %c0_18 = arith.constant 0 : index
    %24 = vector.load %arg8[%c0_17, %c0_18] : memref<16x1xf32, #tpu.memory_space<vmem>>, vector<16x1xf32>
    tpu.vector_store %arg8[%c0_17, %c0_18], %23 {strides = array<i32>} : memref<16x1xf32, #tpu.memory_space<vmem>>, vector<16x1xf32>,
    return
  }
  func.func @transform_0(%arg0: i32) -> (i32, i32) {
    %c0_i32 = arith.constant 0 : i32
    %c0_i32_0 = arith.constant 0 : i32
    return %arg0, %c0_i32 : i32, i32
  }
  func.func @transform_1(%arg0: i32) -> (i32, i32) {
    %c0_i32 = arith.constant 0 : i32
    %c0_i32_0 = arith.constant 0 : i32
    %c0_i32_1 = arith.constant 0 : i32
    return %c0_i32, %c0_i32_0 : i32, i32
  }
  func.func @transform_2(%arg0: i32) -> (i32, i32) {
    %c0_i32 = arith.constant 0 : i32
    %c0_i32_0 = arith.constant 0 : i32
    %c0_i32_1 = arith.constant 0 : i32
    return %c0_i32, %c0_i32_0 : i32, i32
  }
  func.func @transform_3(%arg0: i32) -> (i32, i32) {
    %c0_i32 = arith.constant 0 : i32
    %c0_i32_0 = arith.constant 0 : i32
    %c0_i32_1 = arith.constant 0 : i32
    return %c0_i32, %c0_i32_0 : i32, i32
  }
  func.func @transform_4(%arg0: i32) -> (i32, i32) {
    %c0_i32 = arith.constant 0 : i32
    %c0_i32_0 = arith.constant 0 : i32
    %c0_i32_1 = arith.constant 0 : i32
    return %c0_i32, %c0_i32_0 : i32, i32
  }
  func.func @transform_5(%arg0: i32) -> (i32, i32) {
    %c0_i32 = arith.constant 0 : i32
    %c0_i32_0 = arith.constant 0 : i32
    %c0_i32_1 = arith.constant 0 : i32
    return %c0_i32, %c0_i32_0 : i32, i32
  }
  func.func @transform_6(%arg0: i32) -> (i32, i32) {
    %c0_i32 = arith.constant 0 : i32
    %c0_i32_0 = arith.constant 0 : i32
    %c0_i32_1 = arith.constant 0 : i32
    return %c0_i32, %c0_i32_0 : i32, i32
  }
  func.func @transform_7(%arg0: i32) -> (i32, i32) {
    %c0_i32 = arith.constant 0 : i32
    %c0_i32_0 = arith.constant 0 : i32
    return %arg0, %c0_i32 : i32, i32
  }
}

</mosaic_0001>

<llo_original>
// kernel: tpu_custom_call.1
$region0: #{tpu_custom_call.1}
  #allocation0 [shape = 'u32[]', space=smem, size = 0x4, offset = 0x4, fixed_abs, tag = 'smem constant byte address 0x4 - core index']
  #allocation1 [shape = 'u32[144,128]{1,0:T(1,128)}', space=vmem, size = 0x12000, scoped, tag = 'internal scratch']
  #allocation2 [shape = 'f32[1,1]{1,0:T(1,128)S(6)}', space=smem, size = 0x200, scoped, tag = 'scoped memory for tpu_custom_call.1']
  %s0 = inlined_call_operand.vmem [shape: bf16[20,16], index: 0, kind: input, shape index: {}]
  %s1 = inlined_call_operand.vmem [shape: bf16[16,128], index: 1, kind: input, shape index: {}]
  %s2 = inlined_call_operand.vmem [shape: f32[1,128], index: 2, kind: input, shape index: {}]
  %s3 = inlined_call_operand.vmem [shape: bf16[128,64], index: 3, kind: input, shape index: {}]
  %s4 = inlined_call_operand.vmem [shape: f32[1,64], index: 4, kind: input, shape index: {}]
  %s5 = inlined_call_operand.vmem [shape: f32[1,64], index: 5, kind: input, shape index: {}]
  %s6 = inlined_call_operand.<no memory space> [shape: f32[1,1], index: 6, kind: input, shape index: {}]
  %s7 = inlined_call_operand.vmem [shape: f32[20,1], index: 7, kind: output, shape index: {}]
  %s8 = sld [smem:[#allocation0]]
  $region109: #{tpu_custom_call.1} parent=0
    _
  %s10 = ssub.s32 1, %s8
  %s11 = scalar_select 0, %s10, %s8
  %12 = sst [smem:[#allocation2]] %s6
  $region1: #{tpu_custom_call.1} parent=0
    #allocation3 [shape = 'u8[16384]{0}', space=vmem, size = 0x4000, scoped, tag = 'output window, operand 0']
    loop: start=0, step=1, limit=4
    $region2: #{tpu_custom_call.1} parent=1 // loop_pre_header
      _
    $region3: #{tpu_custom_call.1} parent=1 // loop_header
      %s14 = sphi 0, %s18
      %p15 = scmp.ge.s32.totalorder %s14, 4
      %s24 = sphi 0, %s26
      %s27 = sphi 0, %s24
      %s28 = sphi 0, %s27
      %s44 = sphi 0, %s28
      %s48 = sphi 0, %s48
      %s50 = sphi 0, %s48
      %s51 = sphi 0, %s50
      %s65 = sphi 0, %s51
      %s69 = sphi 0, %s69
      %s71 = sphi 0, %s69
      %s72 = sphi 0, %s71
      %s86 = sphi 0, %s72
      %s90 = sphi 0, %s90
      %s92 = sphi 0, %s90
      %s93 = sphi 0, %s92
      %s107 = sphi 0, %s93
      %s111 = sphi 0, %s111
      %s113 = sphi 0, %s111
      %s114 = sphi 0, %s113
      %s128 = sphi 0, %s114
      %s132 = sphi 0, %s132
      %s134 = sphi 0, %s132
      %s135 = sphi 0, %s134
      %s149 = sphi 0, %s135
      %s153 = sphi 0, %s153
      %s155 = sphi 0, %s153
      %s156 = sphi 0, %s155
      %s170 = sphi 0, %s156
      %s176 = sphi 0, %s178
      %s179 = sphi 0, %s176
      %s180 = sphi 0, %s179
      %s196 = sphi 0, %s180
    $region4: #{tpu_custom_call.1} parent=1 // loop_header_branch
      %17 = sbr.rel (%p15) target = $region8
    $region5: #{tpu_custom_call.1} parent=1 // loop_body
      %s19 = ssub.s32 %s14, 1
      %s20 = ssub.s32 %s14, 2
      %s21 = sadd.s32 %s14, 1
      %s22 = ssub.s32 %s14, %s21
      %p23 = scmp.eq.s32.totalorder %s22, 0
      %s25 = sadd.s32 %s24, 1
      %s26 = scalar_select %p23, %s24, %s25
      %p29 = pneg %p23
      %p30 = scmp.eq.s32.totalorder %s14, 1
      %p31 = por %p29, %p30
      %p32 = scmp.ne.s32.totalorder %s24, %s27
      %p33 = scmp.eq.s32.totalorder %s14, 0
      %p34 = por %p32, %p33
      %p35 = scmp.ne.s32.totalorder %s24, %s27
      %p36 = scmp.eq.s32.totalorder %s19, 1
      %p37 = por %p35, %p36
      %p38 = scmp.ne.s32.totalorder %s27, %s28
      %p39 = scmp.eq.s32.totalorder %s19, 0
      %p40 = por %p38, %p39
      %p41 = scmp.ne.s32.totalorder %s27, %s28
      %p42 = scmp.eq.s32.totalorder %s20, 1
      %p43 = por %p41, %p42
      %p45 = scmp.ne.s32.totalorder %s28, %s44
      %p46 = scmp.eq.s32.totalorder %s20, 0
      %p47 = por %p45, %p46
      %s49 = sadd.s32 %s48, 1
      %p52 = scmp.eq.s32.totalorder %s14, 1
      %p53 = scmp.ne.s32.totalorder %s48, %s50
      %p54 = scmp.eq.s32.totalorder %s14, 0
      %p55 = por %p53, %p54
      %p56 = scmp.ne.s32.totalorder %s48, %s50
      %p57 = scmp.eq.s32.totalorder %s19, 1
      %p58 = por %p56, %p57
      %p59 = scmp.ne.s32.totalorder %s50, %s51
      %p60 = scmp.eq.s32.totalorder %s19, 0
      %p61 = por %p59, %p60
      %p62 = scmp.ne.s32.totalorder %s50, %s51
      %p63 = scmp.eq.s32.totalorder %s20, 1
      %p64 = por %p62, %p63
      %p66 = scmp.ne.s32.totalorder %s51, %s65
      %p67 = scmp.eq.s32.totalorder %s20, 0
      %p68 = por %p66, %p67
      %s70 = sadd.s32 %s69, 1
      %p73 = scmp.eq.s32.totalorder %s14, 1
      %p74 = scmp.ne.s32.totalorder %s69, %s71
      %p75 = scmp.eq.s32.totalorder %s14, 0
      %p76 = por %p74, %p75
      %p77 = scmp.ne.s32.totalorder %s69, %s71
      %p78 = scmp.eq.s32.totalorder %s19, 1
      %p79 = por %p77, %p78
      %p80 = scmp.ne.s32.totalorder %s71, %s72
      %p81 = scmp.eq.s32.totalorder %s19, 0
      %p82 = por %p80, %p81
      %p83 = scmp.ne.s32.totalorder %s71, %s72
      %p84 = scmp.eq.s32.totalorder %s20, 1
      %p85 = por %p83, %p84
      %p87 = scmp.ne.s32.totalorder %s72, %s86
      %p88 = scmp.eq.s32.totalorder %s20, 0
      %p89 = por %p87, %p88
      %s91 = sadd.s32 %s90, 1
      %p94 = scmp.eq.s32.totalorder %s14, 1
      %p95 = scmp.ne.s32.totalorder %s90, %s92
      %p96 = scmp.eq.s32.totalorder %s14, 0
      %p97 = por %p95, %p96
      %p98 = scmp.ne.s32.totalorder %s90, %s92
      %p99 = scmp.eq.s32.totalorder %s19, 1
      %p100 = por %p98, %p99
      %p101 = scmp.ne.s32.totalorder %s92, %s93
      %p102 = scmp.eq.s32.totalorder %s19, 0
      %p103 = por %p101, %p102
      %p104 = scmp.ne.s32.totalorder %s92, %s93
      %p105 = scmp.eq.s32.totalorder %s20, 1
      %p106 = por %p104, %p105
      %p108 = scmp.ne.s32.totalorder %s93, %s107
      %p109 = scmp.eq.s32.totalorder %s20, 0
      %p110 = por %p108, %p109
      %s112 = sadd.s32 %s111, 1
      %p115 = scmp.eq.s32.totalorder %s14, 1
      %p116 = scmp.ne.s32.totalorder %s111, %s113
      %p117 = scmp.eq.s32.totalorder %s14, 0
      %p118 = por %p116, %p117
      %p119 = scmp.ne.s32.totalorder %s111, %s113
      %p120 = scmp.eq.s32.totalorder %s19, 1
      %p121 = por %p119, %p120
      %p122 = scmp.ne.s32.totalorder %s113, %s114
      %p123 = scmp.eq.s32.totalorder %s19, 0
      %p124 = por %p122, %p123
      %p125 = scmp.ne.s32.totalorder %s113, %s114
      %p126 = scmp.eq.s32.totalorder %s20, 1
      %p127 = por %p125, %p126
      %p129 = scmp.ne.s32.totalorder %s114, %s128
      %p130 = scmp.eq.s32.totalorder %s20, 0
      %p131 = por %p129, %p130
      %s133 = sadd.s32 %s132, 1
      %p136 = scmp.eq.s32.totalorder %s14, 1
      %p137 = scmp.ne.s32.totalorder %s132, %s134
      %p138 = scmp.eq.s32.totalorder %s14, 0
      %p139 = por %p137, %p138
      %p140 = scmp.ne.s32.totalorder %s132, %s134
      %p141 = scmp.eq.s32.totalorder %s19, 1
      %p142 = por %p140, %p141
      %p143 = scmp.ne.s32.totalorder %s134, %s135
      %p144 = scmp.eq.s32.totalorder %s19, 0
      %p145 = por %p143, %p144
      %p146 = scmp.ne.s32.totalorder %s134, %s135
      %p147 = scmp.eq.s32.totalorder %s20, 1
      %p148 = por %p146, %p147
      %p150 = scmp.ne.s32.totalorder %s135, %s149
      %p151 = scmp.eq.s32.totalorder %s20, 0
      %p152 = por %p150, %p151
      %s154 = sadd.s32 %s153, 1
      %p157 = scmp.eq.s32.totalorder %s14, 1
      %p158 = scmp.ne.s32.totalorder %s153, %s155
      %p159 = scmp.eq.s32.totalorder %s14, 0
      %p160 = por %p158, %p159
      %p161 = scmp.ne.s32.totalorder %s153, %s155
      %p162 = scmp.eq.s32.totalorder %s19, 1
      %p163 = por %p161, %p162
      %p164 = scmp.ne.s32.totalorder %s155, %s156
      %p165 = scmp.eq.s32.totalorder %s19, 0
      %p166 = por %p164, %p165
      %p167 = scmp.ne.s32.totalorder %s155, %s156
      %p168 = scmp.eq.s32.totalorder %s20, 1
      %p169 = por %p167, %p168
      %p171 = scmp.ne.s32.totalorder %s156, %s170
      %p172 = scmp.eq.s32.totalorder %s20, 0
      %p173 = por %p171, %p172
      %s174 = ssub.s32 %s14, %s21
      %p175 = scmp.eq.s32.totalorder %s174, 0
      %s177 = sadd.s32 %s176, 1
      %s178 = scalar_select %p175, %s176, %s177
      %p181 = pneg %p175
      %p182 = scmp.eq.s32.totalorder %s14, 1
      %p183 = por %p181, %p182
      %p184 = scmp.ne.s32.totalorder %s176, %s179
      %p185 = scmp.eq.s32.totalorder %s14, 0
      %p186 = por %p184, %p185
      %p187 = scmp.ne.s32.totalorder %s176, %s179
      %p188 = scmp.eq.s32.totalorder %s19, 1
      %p189 = por %p187, %p188
      %p190 = scmp.ne.s32.totalorder %s179, %s180
      %p191 = scmp.eq.s32.totalorder %s19, 0
      %p192 = por %p190, %p191
      %p193 = scmp.ne.s32.totalorder %s179, %s180
      %p194 = scmp.eq.s32.totalorder %s20, 1
      %p195 = por %p193, %p194
      %p197 = scmp.ne.s32.totalorder %s180, %s196
      %p198 = scmp.eq.s32.totalorder %s20, 0
      %p199 = por %p197, %p198
      %p200 = scmp.le.s32.totalorder 1, %s14
      %p201 = scmp.lt.s32.totalorder %s14, 3
      %p202 = pnand %p200, %p201
      %p203 = pneg %p202
      // Predicated region
      $region9: #{tpu_custom_call.1} parent=5 // pred_check
        _
      $region10: #{tpu_custom_call.1} parent=5 // pred_check_branch
        %205 = sbr.rel (%p202) target = $region12
      $region11: #{tpu_custom_call.1} parent=5 // pred_region
        %s206 = ssub.s32 %s14, 1
        // Predicated region
        $region13: #{tpu_custom_call.1} parent=11 // pred_check
          %p207 = pneg %p61
        $region14: #{tpu_custom_call.1} parent=11 // pred_check_branch
          %209 = sbr.rel (%p207) target = $region16
        $region15: #{tpu_custom_call.1} parent=11 // pred_region
          _
        $region16: #{tpu_custom_call.1} parent=11 // pred_fallthru
          _
        // Predicated region
        $region17: #{tpu_custom_call.1} parent=11 // pred_check
          %p210 = pneg %p82
        $region18: #{tpu_custom_call.1} parent=11 // pred_check_branch
          %212 = sbr.rel (%p210) target = $region20
        $region19: #{tpu_custom_call.1} parent=11 // pred_region
          _
        $region20: #{tpu_custom_call.1} parent=11 // pred_fallthru
          _
        // Predicated region
        $region21: #{tpu_custom_call.1} parent=11 // pred_check
          %p213 = pneg %p103
        $region22: #{tpu_custom_call.1} parent=11 // pred_check_branch
          %215 = sbr.rel (%p213) target = $region24
        $region23: #{tpu_custom_call.1} parent=11 // pred_region
          _
        $region24: #{tpu_custom_call.1} parent=11 // pred_fallthru
          _
        // Predicated region
        $region25: #{tpu_custom_call.1} parent=11 // pred_check
          %p216 = pneg %p124
        $region26: #{tpu_custom_call.1} parent=11 // pred_check_branch
          %218 = sbr.rel (%p216) target = $region28
        $region27: #{tpu_custom_call.1} parent=11 // pred_region
          _
        $region28: #{tpu_custom_call.1} parent=11 // pred_fallthru
          _
        // Predicated region
        $region29: #{tpu_custom_call.1} parent=11 // pred_check
          %p219 = pneg %p145
        $region30: #{tpu_custom_call.1} parent=11 // pred_check_branch
          %221 = sbr.rel (%p219) target = $region32
        $region31: #{tpu_custom_call.1} parent=11 // pred_region
          _
        $region32: #{tpu_custom_call.1} parent=11 // pred_fallthru
          _
        // Predicated region
        $region33: #{tpu_custom_call.1} parent=11 // pred_check
          %p222 = pneg %p166
        $region34: #{tpu_custom_call.1} parent=11 // pred_check_branch
          %224 = sbr.rel (%p222) target = $region36
        $region35: #{tpu_custom_call.1} parent=11 // pred_region
          _
        $region36: #{tpu_custom_call.1} parent=11 // pred_fallthru
          _
      $region12: #{tpu_custom_call.1} parent=5 // pred_fallthru
        _
      %p225 = scmp.lt.s32.totalorder %s14, 2
      // Predicated region
      $region37: #{tpu_custom_call.1} parent=5 // pred_check
        %p226 = pneg %p225
      $region38: #{tpu_custom_call.1} parent=5 // pred_check_branch
        %228 = sbr.rel (%p226) target = $region40
      $region39: #{tpu_custom_call.1} parent=5 // pred_region
        // Predicated region
        $region41: #{tpu_custom_call.1} parent=39 // pred_check
          %p229 = pneg %p34
        $region42: #{tpu_custom_call.1} parent=39 // pred_check_branch
          %231 = sbr.rel (%p229) target = $region44
        $region43: #{tpu_custom_call.1} parent=39 // pred_region
          %s232 = smul.u32 2, %s14
          %s233 = ssub.s32 3, %s232
          %p234 = scmp.lt.s32.totalorder %s233, 2
          %s235 = scalar_select %p234, %s233, 2
          %s236 = smul.u32 64, %s235
          %p237 = scmp.lt.s32.totalorder %s232, 2
          %s238 = scalar_select %p237, %s232, 2
          %s239 = smul.addr %s238, 4
          %s240 = scalar_lea.vmem %s0, %s239
          %s241 = smul.u32 2, %s14
          %s242 = ssub.s32 3, %s241
          %p243 = scmp.lt.s32.totalorder %s242, 2
          %s244 = scalar_select %p243, %s242, 2
          %s245 = smul.u32 64, %s244
        $region44: #{tpu_custom_call.1} parent=39 // pred_fallthru
          _
      $region40: #{tpu_custom_call.1} parent=5 // pred_fallthru
        _
      %p246 = scmp.le.s32.totalorder 1, %s14
      %p247 = scmp.lt.s32.totalorder %s14, 3
      %p248 = pnand %p246, %p247
      %p249 = pneg %p248
      // Predicated region
      $region45: #{tpu_custom_call.1} parent=5 // pred_check
        _
      $region46: #{tpu_custom_call.1} parent=5 // pred_check_branch
        %251 = sbr.rel (%p248) target = $region48
      $region47: #{tpu_custom_call.1} parent=5 // pred_region
        %s252 = ssub.s32 %s14, 1
        %s253 = smul.u32 2, %s19
        %s254 = ssub.s32 3, %s253
        %p255 = scmp.lt.s32.totalorder %s254, 2
        %s256 = scalar_select %p255, %s254, 2
        %s257 = smul.u32 64, %s256
        %p258 = scmp.lt.s32.totalorder %s253, 2
        %s259 = scalar_select %p258, %s253, 2
        %s260 = smul.addr %s259, 4
        %s261 = scalar_lea.vmem %s0, %s260
        %p262 = pneg %p40
        %p263 = pneg %p37
        %p264 = pneg %p61
        %p265 = pneg %p58
        %p266 = pneg %p82
        %p267 = pneg %p79
        %p268 = pneg %p103
        %p269 = pneg %p100
        %p270 = pneg %p124
        %p271 = pneg %p121
        %p272 = pneg %p145
        %p273 = pneg %p142
        %p274 = pneg %p166
        %p275 = pneg %p163
        %p276 = pneg %p192
        %p277 = pneg %p189
        %s278 = sand.u32 %s179, 1
        %s279 = sand.u32 %s179, 1
        %s280 = smul.addr %s279, 16
        %s281 = scalar_lea.vmem [#allocation3], %s280
        %s282 = smul.u32 2, %s19
        %s283 = ssub.s32 3, %s282
        %p284 = scmp.lt.s32.totalorder %s283, 2
        %s285 = scalar_select %p284, %s283, 2
        %s286 = smul.u32 64, %s285
        %p287 = scmp.lt.s32.totalorder %s282, 2
        %s288 = scalar_select %p287, %s282, 2
        %s289 = smul.addr %s288, 4
        %s290 = scalar_lea.vmem %s0, %s289
        %s291 = smul.u32 2, %s19
        %s292 = ssub.s32 3, %s291
        %p293 = scmp.lt.s32.totalorder %s292, 2
        %s294 = scalar_select %p293, %s292, 2
        %s295 = smul.u32 64, %s294
        %s296 = smul.u32 2, %s19
        %s297 = ssub.s32 3, %s296
        %p298 = scmp.lt.s32.totalorder %s297, 2
        %s299 = scalar_select %p298, %s297, 2
        %s300 = smul.u32 128, %s299
        %v302 = vld [vmem:[%s290] sm:$0xf]
        %v303 = vld [vmem:[%s290 + $0x4] sm:$0xf]
        %v304 = vld [vmem:[%s1] sm:$0xf]
        %v305 = vld [vmem:[%s1 + $0x4] sm:$0xf]
        %v306 = vld [vmem:[%s2] sm:$0x1]
        %v308 = vlaneseq
        %v309 = vshrl.u32 %v308, 7
        %v310 = vsub.s32 0, %v309
        %v311 = vrot.slane %v306, %v310
        %v315 = vunpack.c.l.b16 %v302
        %v316 = vunpack.c.l.b16 %v303
        %v317 = vpack.c.b16 %v316, %v315
        %v320 = vunpack.c.l.b16 %v304
        %v321 = vunpack.c.l.b16 %v305
        %v322 = vpack.c.b16 %v321, %v320
        %vm324 = vcmask 130048
        %v326 = vsel %vm324, %v317, 0
        %328 = vmatprep.subr.bf16.mxu0 0
        %329 = vmatpush1.bf16.msra.mxu0 %v322
        %330 = vmatprep.subr.bf16.mxu0 0
        %331 = vmatpush1.bf16.msra.mxu0 0
        %332 = vmatprep.subr.bf16.mxu0 0
        %333 = vmatpush1.bf16.msra.mxu0 0
        %334 = vmatprep.subr.bf16.mxu0 0
        %335 = vmatpush1.bf16.msra.mxu0 0
        %336 = vmatprep.subr.bf16.mxu0 0
        %337 = vmatpush1.bf16.msra.mxu0 0
        %338 = vmatprep.subr.bf16.mxu0 0
        %339 = vmatpush1.bf16.msra.mxu0 0
        %340 = vmatprep.subr.bf16.mxu0 0
        %341 = vmatpush1.bf16.msra.mxu0 0
        %342 = vmatprep.subr.bf16.mxu0 0
        %343 = vmatpush1.bf16.msra.mxu0 0
        %344 = vmatprep.subr.bf16.mxu0 0
        %345 = vmatpush1.bf16.msra.mxu0 0
        %346 = vmatprep.subr.bf16.mxu0 0
        %347 = vmatpush1.bf16.msra.mxu0 0
        %348 = vmatprep.subr.bf16.mxu0 0
        %349 = vmatpush1.bf16.msra.mxu0 0
        %350 = vmatprep.subr.bf16.mxu0 0
        %351 = vmatpush1.bf16.msra.mxu0 0
        %352 = vmatprep.subr.bf16.mxu0 0
        %353 = vmatpush1.bf16.msra.mxu0 0
        %354 = vmatprep.subr.bf16.mxu0 0
        %355 = vmatpush1.bf16.msra.mxu0 0
        %356 = vmatprep.subr.bf16.mxu0 0
        %357 = vmatpush1.bf16.msra.mxu0 0
        %358 = vmatprep.subr.bf16.mxu0 0
        %359 = vmatpush1.bf16.msra.mxu0 0
        %360 = vmatprep.mubr.bf16.mxu0 0
        %361 = vmatmul.mubr.bf16.gmra.mrb[0].mxu0 %v326
        %v362 = vpop.f32.mrb[0].mxu0
        %v363 = vadd.f32 %v311, %v362
        %v364 = vpop.f32.mrb[0].mxu0
        %v365 = vpop.f32.mrb[0].mxu0
        %v366 = vadd.f32 %v311, %v365
        %v367 = vpop.f32.mrb[0].mxu0
        %368 = vdwg.mxu0
        %v369 = vmax.f32 %v363, 0.0
        %v370 = vmax.f32 %v366, 0.0
        %v371 = vpack.c.bf16 %v370, %v369
        %v372 = vld [vmem:[%s3] sm:$0xf]
        %v373 = vld [vmem:[%s3 + $0x4] sm:$0xf]
        %v374 = vld [vmem:[%s3 + $0x8] sm:$0xf]
        %v375 = vld [vmem:[%s3 + $0xc] sm:$0xf]
        %v376 = vld [vmem:[%s3 + $0x10] sm:$0xf]
        %v377 = vld [vmem:[%s3 + $0x14] sm:$0xf]
        %v378 = vld [vmem:[%s3 + $0x18] sm:$0xf]
        %v379 = vld [vmem:[%s3 + $0x1c] sm:$0xf]
        %v380 = vld [vmem:[%s3 + $0x20] sm:$0xf]
        %v381 = vld [vmem:[%s3 + $0x24] sm:$0xf]
        %v382 = vld [vmem:[%s3 + $0x28] sm:$0xf]
        %v383 = vld [vmem:[%s3 + $0x2c] sm:$0xf]
        %v384 = vld [vmem:[%s3 + $0x30] sm:$0xf]
        %v385 = vld [vmem:[%s3 + $0x34] sm:$0xf]
        %v386 = vld [vmem:[%s3 + $0x38] sm:$0xf]
        %v387 = vld [vmem:[%s3 + $0x3c] sm:$0xf]
        %v388 = vld [vmem:[%s4] sm:$0x1]
        %v390 = vlaneseq
        %v391 = vshrl.u32 %v390, 7
        %v392 = vsub.s32 0, %v391
        %v393 = vrot.slane %v388, %v392
        %v411 = vunpack.c.l.b16 %v372
        %v412 = vunpack.c.l.b16 %v373
        %v413 = vunpack.c.l.b16 %v374
        %v414 = vunpack.c.l.b16 %v375
        %v415 = vunpack.c.l.b16 %v376
        %v416 = vunpack.c.l.b16 %v377
        %v417 = vunpack.c.l.b16 %v378
        %v418 = vunpack.c.l.b16 %v379
        %v419 = vunpack.c.l.b16 %v380
        %v420 = vunpack.c.l.b16 %v381
        %v421 = vunpack.c.l.b16 %v382
        %v422 = vunpack.c.l.b16 %v383
        %v423 = vunpack.c.l.b16 %v384
        %v424 = vunpack.c.l.b16 %v385
        %v425 = vunpack.c.l.b16 %v386
        %v426 = vunpack.c.l.b16 %v387
        %v427 = vpack.c.b16 %v412, %v411
        %v428 = vpack.c.b16 %v414, %v413
        %v429 = vpack.c.b16 %v416, %v415
        %v430 = vpack.c.b16 %v418, %v417
        %v431 = vpack.c.b16 %v420, %v419
        %v432 = vpack.c.b16 %v422, %v421
        %v433 = vpack.c.b16 %v424, %v423
        %v434 = vpack.c.b16 %v426, %v425
        %443 = vmatprep.subr.bf16.mxu0 0
        %444 = vmatpush1.bf16.msra.mxu0 %v427
        %445 = vmatprep.subr.bf16.mxu0 0
        %446 = vmatpush1.bf16.msra.mxu0 %v428
        %447 = vmatprep.subr.bf16.mxu0 0
        %448 = vmatpush1.bf16.msra.mxu0 %v429
        %449 = vmatprep.subr.bf16.mxu0 0
        %450 = vmatpush1.bf16.msra.mxu0 %v430
        %451 = vmatprep.subr.bf16.mxu0 0
        %452 = vmatpush1.bf16.msra.mxu0 %v431
        %453 = vmatprep.subr.bf16.mxu0 0
        %454 = vmatpush1.bf16.msra.mxu0 %v432
        %455 = vmatprep.subr.bf16.mxu0 0
        %456 = vmatpush1.bf16.msra.mxu0 %v433
        %457 = vmatprep.subr.bf16.mxu0 0
        %458 = vmatpush1.bf16.msra.mxu0 %v434
        %459 = vmatprep.subr.bf16.mxu0 0
        %460 = vmatpush1.bf16.msra.mxu0 0
        %461 = vmatprep.subr.bf16.mxu0 0
        %462 = vmatpush1.bf16.msra.mxu0 0
        %463 = vmatprep.subr.bf16.mxu0 0
        %464 = vmatpush1.bf16.msra.mxu0 0
        %465 = vmatprep.subr.bf16.mxu0 0
        %466 = vmatpush1.bf16.msra.mxu0 0
        %467 = vmatprep.subr.bf16.mxu0 0
        %468 = vmatpush1.bf16.msra.mxu0 0
        %469 = vmatprep.subr.bf16.mxu0 0
        %470 = vmatpush1.bf16.msra.mxu0 0
        %471 = vmatprep.subr.bf16.mxu0 0
        %472 = vmatpush1.bf16.msra.mxu0 0
        %473 = vmatprep.subr.bf16.mxu0 0
        %474 = vmatpush1.bf16.msra.mxu0 0
        %475 = vmatprep.mubr.bf16.mxu0 0
        %476 = vmatmul.mubr.bf16.gmra.mrb[0].mxu0 %v371
        %v477 = vpop.f32.mrb[0].mxu0
        %v478 = vadd.f32 %v393, %v477
        %v479 = vpop.f32.mrb[0].mxu0
        %v480 = vpop.f32.mrb[0].mxu0
        %v481 = vadd.f32 %v393, %v480
        %v482 = vpop.f32.mrb[0].mxu0
        %483 = vdwg.mxu0
        %v484 = vmax.f32 %v478, 0.0
        %v485 = vmax.f32 %v481, 0.0
        %v486 = vld [vmem:[%s5] sm:$0x1]
        %v488 = vlaneseq
        %v489 = vshrl.u32 %v488, 7
        %v490 = vsub.s32 0, %v489
        %v491 = vrot.slane %v486, %v490
        %v493 = vmul.f32 %v484, %v491
        %v494 = vmul.f32 %v485, %v491
        %vm495 = vcmask 523264
        %v496 = vsel %vm495, %v493, 0.0
        %497 = vadd.xlane.f32.xlu0 %v496
        %v498 = vpop.xlane.xlu0 %497
        %v499 = vsel %vm495, %v494, 0.0
        %500 = vadd.xlane.f32.xlu0 %v499
        %v501 = vpop.xlane.xlu0 %500
        %s502 = sld [smem:[#allocation2]]
        %v503 = vstv %s502
        %v504 = vadd.f32 %v498, %v503
        %v505 = vadd.f32 %v501, %v503
        %vm506 = vcmask 7168
        %507 = vst.msk [vmem:[%s281] sm:$0xff] %vm506, %v504
        %508 = vst.msk [vmem:[%s281 + $0x8] sm:$0xff] %vm506, %v505
        %s509 = sand.u32 %s179, 1
        %s510 = sand.u32 %s179, 1
        %s511 = smul.addr %s510, 16
        %s512 = scalar_lea.vmem [#allocation3], %s511
        // Predicated region
        $region49: #{tpu_custom_call.1} parent=47 // pred_check
          %p513 = pneg %p189
        $region50: #{tpu_custom_call.1} parent=47 // pred_check_branch
          %515 = sbr.rel (%p513) target = $region52
        $region51: #{tpu_custom_call.1} parent=47 // pred_region
          %s516 = smul.u32 2, %s19
          %s517 = ssub.s32 3, %s516
          %p518 = scmp.lt.s32.totalorder %s517, 2
          %s519 = scalar_select %p518, %s517, 2
          %s520 = smul.u32 128, %s519
          %p521 = scmp.ne.s32.totalorder 0, %s520
          %s522 = smul.addr %s516, 8
          %s523 = scalar_lea.vmem %s7, %s522
          // Predicated region
          $region53: #{tpu_custom_call.1} parent=51 // pred_check
            %p524 = pneg %p521
          $region54: #{tpu_custom_call.1} parent=51 // pred_check_branch
            %526 = sbr.rel (%p524) target = $region56
          $region55: #{tpu_custom_call.1} parent=51 // pred_region
            // Predicated region
            $region57: #{tpu_custom_call.1} parent=55 // pred_check
              _
            $region58: #{tpu_custom_call.1} parent=55 // pred_check_branch
              %528 = sbr.rel (0) target = $region60
            $region59: #{tpu_custom_call.1} parent=55 // pred_region
              // Predicated region
              $region79: #{tpu_custom_call.1} parent=59 // pred_check
                _
              $region80: #{tpu_custom_call.1} parent=59 // pred_check_branch
                %579 = sbr.rel (0) target = $region82
              $region81: #{tpu_custom_call.1} parent=59 // pred_region
                %s580 = sshrl.u32 %s519, 1
                // While loop
                $region83: #{tpu_custom_call.1} parent=81 // loop_pre_header
                  _
                $region84: #{tpu_custom_call.1} parent=81 // loop_header
                  %s582 = sphi 0, %s584
                  %p583 = scmp.ge.s32.totalorder %s582, %s580
                  %s587 = sphi 0, %s596
                  %s588 = sphi %s512, %s599
                  %s589 = sphi %s523, %s600
                $region85: #{tpu_custom_call.1} parent=81 // loop_header_branch
                  %586 = sbr.rel (%p583) target = $region89
                $region86: #{tpu_custom_call.1} parent=81 // loop_body
                  %v590 = vld [vmem:[%s588] sm:$0xff]
                  %591 = vst [vmem:[%s589] sm:$0xff] %v590
                  %v592 = vld [vmem:[%s588 + $0x8] sm:$0xff]
                  %593 = vst [vmem:[%s589 + $0x8] sm:$0xff] %v592
                  %s594 = sadd.s32 1, %s587
                  %p595 = scmp.ge.s32.totalorder %s594, %s580
                  %s596 = scalar_select %p595, 0, %s594
                  %s597 = smul.u32 %s596, 16
                  %s598 = smul.u32 %s596, 16
                  %s599 = scalar_lea.vmem %s512, %s597 [#allocation3]
                  %s600 = scalar_lea.vmem %s523, %s598
                $region87: #{tpu_custom_call.1} parent=81 // loop_footer
                  %s584 = sadd.s32 %s582, 1
                $region88: #{tpu_custom_call.1} parent=81 // loop_footer_branch
                  %581 = sbr.rel target = $region84
                $region89: #{tpu_custom_call.1} parent=81 // loop_exit
                  _
                %s601 = sshrl.u32 %s519, 1
                %s602 = sand.u32 %s519, 1
                %s603 = smul.u32 %s601, 2
                %s604 = smul.u32 8, %s603
                %s605 = scalar_lea.vmem %s512, %s604 [#allocation3]
                %s606 = smul.u32 8, %s603
                %s607 = scalar_lea.vmem %s523, %s606
                // While loop
                $region90: #{tpu_custom_call.1} parent=81 // loop_pre_header
                  _
                $region91: #{tpu_custom_call.1} parent=81 // loop_header
                  %s609 = sphi 0, %s611
                  %p610 = scmp.ge.s32.totalorder %s609, %s602
                  %s614 = sphi 0, %s621
                  %s615 = sphi %s605, %s624
                  %s616 = sphi %s607, %s625
                $region92: #{tpu_custom_call.1} parent=81 // loop_header_branch
                  %613 = sbr.rel (%p610) target = $region96
                $region93: #{tpu_custom_call.1} parent=81 // loop_body
                  %v617 = vld [vmem:[%s615] sm:$0xff]
                  %618 = vst [vmem:[%s616] sm:$0xff] %v617
                  %s619 = sadd.s32 1, %s614
                  %p620 = scmp.ge.s32.totalorder %s619, %s602
                  %s621 = scalar_select %p620, 0, %s619
                  %s622 = smul.u32 %s621, 8
                  %s623 = smul.u32 %s621, 8
                  %s624 = scalar_lea.vmem %s605, %s622 [#allocation3]
                  %s625 = scalar_lea.vmem %s607, %s623
                $region94: #{tpu_custom_call.1} parent=81 // loop_footer
                  %s611 = sadd.s32 %s609, 1
                $region95: #{tpu_custom_call.1} parent=81 // loop_footer_branch
                  %608 = sbr.rel target = $region91
                $region96: #{tpu_custom_call.1} parent=81 // loop_exit
                  _
              $region82: #{tpu_custom_call.1} parent=59 // pred_fallthru
                _
              // Predicated region
              $region97: #{tpu_custom_call.1} parent=59 // pred_check
                _
              $region98: #{tpu_custom_call.1} parent=59 // pred_check_branch
                %627 = sbr.rel target = $region100
              $region99: #{tpu_custom_call.1} parent=59 // pred_region
                _
              $region100: #{tpu_custom_call.1} parent=59 // pred_fallthru
                _
            $region60: #{tpu_custom_call.1} parent=55 // pred_fallthru
              _
            // Predicated region
            $region61: #{tpu_custom_call.1} parent=55 // pred_check
              _
            $region62: #{tpu_custom_call.1} parent=55 // pred_check_branch
              %530 = sbr.rel target = $region64
            $region63: #{tpu_custom_call.1} parent=55 // pred_region
              %s532 = sshrl.u32 %s519, 1
              // While loop
              $region65: #{tpu_custom_call.1} parent=63 // loop_pre_header
                _
              $region66: #{tpu_custom_call.1} parent=63 // loop_header
                %s534 = sphi 0, %s536
                %p535 = scmp.ge.s32.totalorder %s534, %s532
                %s539 = sphi 0, %s548
                %s540 = sphi %s512, %s551
                %s541 = sphi %s523, %s552
              $region67: #{tpu_custom_call.1} parent=63 // loop_header_branch
                %538 = sbr.rel (%p535) target = $region71
              $region68: #{tpu_custom_call.1} parent=63 // loop_body
                %v542 = vld [vmem:[%s540] sm:$0xff]
                %543 = vst [vmem:[%s541] sm:$0xff] %v542
                %v544 = vld [vmem:[%s540 + $0x8] sm:$0xff]
                %545 = vst [vmem:[%s541 + $0x8] sm:$0xff] %v544
                %s546 = sadd.s32 1, %s539
                %p547 = scmp.ge.s32.totalorder %s546, %s532
                %s548 = scalar_select %p547, 0, %s546
                %s549 = smul.u32 %s548, 16
                %s550 = smul.u32 %s548, 16
                %s551 = scalar_lea.vmem %s512, %s549 [#allocation3]
                %s552 = scalar_lea.vmem %s523, %s550
              $region69: #{tpu_custom_call.1} parent=63 // loop_footer
                %s536 = sadd.s32 %s534, 1
              $region70: #{tpu_custom_call.1} parent=63 // loop_footer_branch
                %533 = sbr.rel target = $region66
              $region71: #{tpu_custom_call.1} parent=63 // loop_exit
                _
              %s553 = sshrl.u32 %s519, 1
              %s554 = sand.u32 %s519, 1
              %s555 = smul.u32 %s553, 2
              %s556 = smul.u32 8, %s555
              %s557 = scalar_lea.vmem %s512, %s556 [#allocation3]
              %s558 = smul.u32 8, %s555
              %s559 = scalar_lea.vmem %s523, %s558
              // While loop
              $region72: #{tpu_custom_call.1} parent=63 // loop_pre_header
                _
              $region73: #{tpu_custom_call.1} parent=63 // loop_header
                %s561 = sphi 0, %s563
                %p562 = scmp.ge.s32.totalorder %s561, %s554
                %s566 = sphi 0, %s573
                %s567 = sphi %s557, %s576
                %s568 = sphi %s559, %s577
              $region74: #{tpu_custom_call.1} parent=63 // loop_header_branch
                %565 = sbr.rel (%p562) target = $region78
              $region75: #{tpu_custom_call.1} parent=63 // loop_body
                %v569 = vld [vmem:[%s567] sm:$0xff]
                %570 = vst [vmem:[%s568] sm:$0xff] %v569
                %s571 = sadd.s32 1, %s566
                %p572 = scmp.ge.s32.totalorder %s571, %s554
                %s573 = scalar_select %p572, 0, %s571
                %s574 = smul.u32 %s573, 8
                %s575 = smul.u32 %s573, 8
                %s576 = scalar_lea.vmem %s557, %s574 [#allocation3]
                %s577 = scalar_lea.vmem %s559, %s575
              $region76: #{tpu_custom_call.1} parent=63 // loop_footer
                %s563 = sadd.s32 %s561, 1
              $region77: #{tpu_custom_call.1} parent=63 // loop_footer_branch
                %560 = sbr.rel target = $region73
              $region78: #{tpu_custom_call.1} parent=63 // loop_exit
                _
            $region64: #{tpu_custom_call.1} parent=55 // pred_fallthru
              _
          $region56: #{tpu_custom_call.1} parent=51 // pred_fallthru
            _
          %628 = vnop
        $region52: #{tpu_custom_call.1} parent=47 // pred_fallthru
          _
      $region48: #{tpu_custom_call.1} parent=5 // pred_fallthru
        _
      %p629 = scmp.le.s32.totalorder 2, %s14
      // Predicated region
      $region101: #{tpu_custom_call.1} parent=5 // pred_check
        %p630 = pneg %p629
      $region102: #{tpu_custom_call.1} parent=5 // pred_check_branch
        %632 = sbr.rel (%p630) target = $region104
      $region103: #{tpu_custom_call.1} parent=5 // pred_region
        %s633 = ssub.s32 %s14, 2
        // Predicated region
        $region105: #{tpu_custom_call.1} parent=103 // pred_check
          %p634 = pneg %p195
        $region106: #{tpu_custom_call.1} parent=103 // pred_check_branch
          %636 = sbr.rel (%p634) target = $region108
        $region107: #{tpu_custom_call.1} parent=103 // pred_region
          %s637 = sand.u32 %s180, 1
          %s638 = sand.u32 %s180, 1
          %s639 = smul.addr %s638, 16
          %s640 = scalar_lea.vmem [#allocation3], %s639
        $region108: #{tpu_custom_call.1} parent=103 // pred_fallthru
          _
      $region104: #{tpu_custom_call.1} parent=5 // pred_fallthru
        _
    $region6: #{tpu_custom_call.1} parent=1 // loop_footer
      %s18 = sadd.s32 1, %s14
    $region7: #{tpu_custom_call.1} parent=1 // loop_footer_branch
      %13 = sbr.rel target = $region3
    $region8: #{tpu_custom_call.1} parent=1 // loop_exit
      _

</llo_original>
